<compile_context>
chip_gen: v5e
topology: v5e:2x2
jax: 0.10.0
libtpu: 0.0.40
codegen_flags: <defaults>
</compile_context>

<pallas_src>
import jax
import jax.numpy as jnp
import numpy as np
from jax.experimental import pallas as pl
from jax.experimental.pallas import tpu as pltpu

PAD = 2        # Conv1d padding (circular)
KSIZE = 3      # Conv1d kernel size
LANE = 128
_POOL_OFF = 8  # sublane-aligned offset of conv rows inside the pool scratch


def conv_stats_kernel(x_ref, w_ref, b_ref, y_ref, s_ref, sq_ref):
    """Batch-block: circular conv as K accumulating MXU matmuls + BN partial stats.

    x_ref : [Bt, L+4, Cp]  circular-padded input (compute dtype, e.g. bf16)
    w_ref : [K,  Cp,  Cp]  conv weight, w_ref[k][i, o] = W[o, i, k] (compute dtype)
    b_ref : [1, Cp]        conv bias (f32)
    y_ref : [Bt, Lc, Cp]   conv output (compute dtype), Lc = L + 2
    s_ref, sq_ref : [1, 1, Cp]  partial sum / sum-of-squares of this block (f32)
    """
    Bt = x_ref.shape[0]
    Cp = x_ref.shape[2]
    Lc = y_ref.shape[1]
    K = w_ref.shape[0]

    bias = b_ref[...]                                   # [1, Cp], hoisted
    s_acc = jnp.zeros((1, Cp), jnp.float32)
    sq_acc = jnp.zeros((1, Cp), jnp.float32)

    for bb in range(Bt):                                # unrolled, Bt is static
        acc = jnp.zeros((Lc, Cp), jnp.float32)
        for k in range(K):                              # 3 accumulating MXU pushes
            acc = acc + jnp.dot(x_ref[bb, pl.ds(k, Lc), :], w_ref[k],
                                preferred_element_type=jnp.float32)
        y = acc + bias                                  # f32
        y_ref[bb] = y.astype(y_ref.dtype)               # narrow (bf16) store
        s_acc = s_acc + jnp.sum(y, axis=0, keepdims=True)
        sq_acc = sq_acc + jnp.sum(y * y, axis=0, keepdims=True)

    s_ref[0] = s_acc
    sq_ref[0] = sq_acc


def norm_pool_kernel(y_ref, sc_ref, sh_ref, o_ref, zs_ref):
    """Batch-block: folded BN affine + ELU + MaxPool1d(k=3, s=2, p=1).

    y_ref : [Bt, Lc, Cp]   conv output (compute dtype)
    sc/sh : [1, Cp]        folded BN scale / shift (f32)
    o_ref : [Bt, Lp, Cp]   pooled output
    zs_ref: [Lc+16, Cp]    f32 scratch; conv rows live at aligned offset 8
    """
    Bt, Lc, Cp = y_ref.shape
    Lp = o_ref.shape[1]

    sc = sc_ref[...]
    sh = sh_ref[...]
    ninf = jnp.full((1, Cp), -jnp.inf, jnp.float32)

    # -inf sentinels for the pool windows that straddle the sequence ends.
    # (Never overwritten by the aligned data store below.)
    zs_ref[pl.ds(_POOL_OFF - 1, 1), :] = ninf
    zs_ref[pl.ds(_POOL_OFF + Lc, 1), :] = ninf

    for bb in range(Bt):
        z = y_ref[bb].astype(jnp.float32) * sc + sh          # folded BatchNorm
        z = jnp.where(z > 0, z, jnp.exp(jnp.minimum(z, 0.0)) - 1.0)  # ELU(alpha=1)
        zs_ref[pl.ds(_POOL_OFF, Lc), :] = z                  # one ALIGNED dense store
        # three sublane-strided reads give the k=3, stride=2 pool windows
        w0 = zs_ref[pl.ds(_POOL_OFF - 1, Lp, stride=2), :]   # z[2t-1]
        w1 = zs_ref[pl.ds(_POOL_OFF, Lp, stride=2), :]       # z[2t]
        w2 = zs_ref[pl.ds(_POOL_OFF + 1, Lp, stride=2), :]   # z[2t+1]
        o_ref[bb] = jnp.maximum(jnp.maximum(w0, w1), w2).astype(o_ref.dtype)


def _pick_batch_tile(B, Lpad, Lc, Lp, Cp, itemsize):
    """Largest divisor of B whose per-step footprint stays well under VMEM budget."""
    per_batch = (2 * (Lpad + 2 * Lc) * Cp * itemsize   # double-buffered x / y streams
                 + 2 * Lp * Cp * 4                     # double-buffered f32 output
                 + Lc * Cp * 4)                        # f32 accumulator
    fixed = 2 * KSIZE * Cp * Cp * itemsize + (Lc + 16) * Cp * 4
    budget = 24 * 1024 * 1024
    cap = max(1, (budget - fixed) // max(per_batch, 1))
    cap = min(cap, B, max(1, 1024 // max(Lc, 1)))      # keep several grid steps
    bt = 1
    for d in range(1, B + 1):
        if B % d == 0 and d <= cap:
            bt = d
    return bt


def conv_layer_forward(x, w, b, gamma, beta, *, compute_dtype=jnp.bfloat16):
    """x: [B, L, C]; w: [C_out, C_in, K] (PyTorch Conv1d layout); b/gamma/beta: [C]."""
    B, L, C = x.shape
    K = w.shape[-1]
    Lpad = L + 2 * PAD                    # circular-padded length
    Lc = Lpad - K + 1                     # conv output length = L + 2
    Lp = (Lc - 1) // 2 + 1                # MaxPool(k=3, s=2, p=1) output length

    # lane-dense channel padding (padded channels carry zero weight/bias/gamma/beta)
    Cp = ((C + LANE - 1) // LANE) * LANE
    pc = Cp - C

    # circular pad done host-side: removes the in-kernel shifted-copy concat
    xf = jnp.concatenate([x[:, L - PAD:, :], x, x[:, :PAD, :]], axis=1)
    xf = jnp.pad(xf, ((0, 0), (0, 0), (0, pc))).astype(compute_dtype)  # [B, Lpad, Cp]

    wT = jnp.transpose(w, (2, 1, 0)).astype(jnp.float32)               # [K, C_in, C_out]
    wT = jnp.pad(wT, ((0, 0), (0, pc), (0, pc)))
    w2 = wT.astype(compute_dtype)                                      # [K, Cp, Cp]
    b2 = jnp.pad(b.astype(jnp.float32), (0, pc)).reshape(1, Cp)
    g2 = jnp.pad(gamma.astype(jnp.float32), (0, pc)).reshape(1, Cp)
    be2 = jnp.pad(beta.astype(jnp.float32), (0, pc)).reshape(1, Cp)

    Bt = _pick_batch_tile(B, Lpad, Lc, Lp, Cp, jnp.dtype(compute_dtype).itemsize)
    nblk = B // Bt

    # VMEM limit: large blocks on v5e/v6e (128 MiB physical), conservative on v7x (64 MiB).
    try:
        cap_bytes = getattr(pltpu.get_tpu_info(), "vmem_capacity_bytes", 64 * 1024 * 1024)
    except Exception:  # pragma: no cover - defensive
        cap_bytes = 64 * 1024 * 1024
    vmem_limit = int(max(32 * 1024 * 1024,
                         min(96 * 1024 * 1024, (cap_bytes * 3) // 4)))

    cparams = pltpu.CompilerParams(
        dimension_semantics=("parallel",),
        vmem_limit_bytes=vmem_limit,
    )

    # ---- pass 1: conv (+bias) and per-block partial BN statistics ----
    y, ps, psq = pl.pallas_call(
        conv_stats_kernel,
        out_shape=(jax.ShapeDtypeStruct((B, Lc, Cp), compute_dtype),
                   jax.ShapeDtypeStruct((nblk, 1, Cp), jnp.float32),
                   jax.ShapeDtypeStruct((nblk, 1, Cp), jnp.float32)),
        grid=(nblk,),
        in_specs=[pl.BlockSpec((Bt, Lpad, Cp), lambda bi: (bi, 0, 0)),
                  pl.BlockSpec((K, Cp, Cp), lambda bi: (0, 0, 0)),
                  pl.BlockSpec((1, Cp), lambda bi: (0, 0))],
        out_specs=(pl.BlockSpec((Bt, Lc, Cp), lambda bi: (bi, 0, 0)),
                   pl.BlockSpec((1, 1, Cp), lambda bi: (bi, 0, 0)),
                   pl.BlockSpec((1, 1, Cp), lambda bi: (bi, 0, 0))),
        compiler_params=cparams,
    )(xf, w2, b2)

    # ---- fold train-mode BN (batch stats, biased variance) into scale/shift ----
    n = jnp.float32(B * Lc)
    mean = jnp.sum(ps, axis=0) / n                                     # [1, Cp]
    var = jnp.maximum(jnp.sum(psq, axis=0) / n - mean * mean, 0.0)     # [1, Cp]
    inv = jax.lax.rsqrt(var + 1e-5)
    scale = inv * g2
    shift = be2 - mean * scale

    # ---- pass 2: folded BN + ELU + maxpool ----
    out = pl.pallas_call(
        norm_pool_kernel,
        out_shape=jax.ShapeDtypeStruct((B, Lp, Cp), x.dtype),
        grid=(nblk,),
        in_specs=[pl.BlockSpec((Bt, Lc, Cp), lambda bi: (bi, 0, 0)),
                  pl.BlockSpec((1, Cp), lambda bi: (0, 0)),
                  pl.BlockSpec((1, Cp), lambda bi: (0, 0))],
        out_specs=pl.BlockSpec((Bt, Lp, Cp), lambda bi: (bi, 0, 0)),
        scratch_shapes=[pltpu.VMEM((Lc + 16, Cp), jnp.float32)],
        compiler_params=cparams,
    )(y, scale, shift)

    return out[:, :, :C]


def ref_forward(x, w, b, gamma, beta):
    """Pure-JAX reference of the PyTorch forward (train-mode BatchNorm)."""
    B, L, C = x.shape
    xc = jnp.transpose(x, (0, 2, 1))                                  # [B, C, L]
    xp = jnp.concatenate([xc[:, :, -2:], xc, xc[:, :, :2]], axis=2)   # circular pad 2
    y = jax.lax.conv_general_dilated(
        xp, w, window_strides=(1,), padding='VALID',
        dimension_numbers=('NCH', 'OIH', 'NCH')) + b[None, :, None]   # [B, C, L+2]
    mean = y.mean(axis=(0, 2), keepdims=True)
    var = ((y - mean) ** 2).mean(axis=(0, 2), keepdims=True)
    yn = (y - mean) / jnp.sqrt(var + 1e-5) * gamma[None, :, None] + beta[None, :, None]
    z = jnp.where(yn > 0, yn, jnp.exp(jnp.minimum(yn, 0.0)) - 1.0)
    zp = jnp.pad(z, ((0, 0), (0, 0), (1, 1)), constant_values=-jnp.inf)
    Lc = z.shape[2]
    Lp = (Lc - 1) // 2 + 1
    pooled = jnp.stack([zp[:, :, 2 * t:2 * t + 3].max(axis=2) for t in range(Lp)], axis=2)
    return jnp.transpose(pooled, (0, 2, 1))                           # [B, Lp, C]


if __name__ == "__main__":
    B, L, C = 2, 16, 32
    key = jax.random.PRNGKey(0)
    kx, kw, kb, kg, kbe = jax.random.split(key, 5)

    x = jax.random.normal(kx, (B, L, C), jnp.float32)
    # Deterministic synthetic parameters (shapes from ConvLayer.__init__)
    w = jax.random.normal(kw, (C, C, 3), jnp.float32) * (1.0 / (3 * C) ** 0.5)  # Conv1d weight
    b = jax.random.normal(kb, (C,), jnp.float32) * 0.1                          # Conv1d bias
    gamma = 1.0 + 0.1 * jax.random.normal(kg, (C,), jnp.float32)                # BN weight
    beta = 0.1 * jax.random.normal(kbe, (C,), jnp.float32)                      # BN bias

    Lp = ((L + 2) - 1) // 2 + 1
    ref = jax.block_until_ready(ref_forward(x, w, b, gamma, beta))

    # exact-math (f32 operands) path: tight structural check
    out_f32 = jax.block_until_ready(
        conv_layer_forward(x, w, b, gamma, beta, compute_dtype=jnp.float32))
    assert out_f32.shape == (B, Lp, C), out_f32.shape
    np.testing.assert_allclose(np.asarray(out_f32), np.asarray(ref), rtol=2e-4, atol=2e-4)

    # default fast path: bf16 MXU operands + bf16 intermediate y, f32 accumulation/stats
    out = jax.block_until_ready(conv_layer_forward(x, w, b, gamma, beta))
    assert out.shape == (B, Lp, C), out.shape
    np.testing.assert_allclose(np.asarray(out), np.asarray(ref), rtol=5e-2, atol=5e-2)

    print("KERNEL_OK")
</pallas_src>

<mosaic_0001>
module attributes {stable_mosaic.version = 11 : i64} {
  func.func @conv_stats_kernel(%arg0: i32, %arg1: memref<2x20x128xf32, #tpu.memory_space<vmem>>, %arg2: memref<3x128x128xf32, #tpu.memory_space<vmem>>, %arg3: memref<1x128xf32, #tpu.memory_space<vmem>>, %arg4: memref<2x18x128xf32, #tpu.memory_space<vmem>>, %arg5: memref<1x1x128xf32, #tpu.memory_space<vmem>>, %arg6: memref<1x1x128xf32, #tpu.memory_space<vmem>>) attributes {dimension_semantics = [#tpu.dimension_semantics<parallel>], iteration_bounds = array<i64: 1>, scalar_prefetch = 0 : i64, scratch_operands = 0 : i64, tpu.core_type = #tpu.core_type<tc>, window_params = [{transform_indices = @transform_0, window_bounds = array<i64: 2, 20, 128>}, {pipeline_mode = #tpu.pipeline_mode<synchronous>, transform_indices = @transform_1, window_bounds = array<i64: 3, 128, 128>}, {pipeline_mode = #tpu.pipeline_mode<synchronous>, transform_indices = @transform_2, window_bounds = array<i64: 1, 128>}, {transform_indices = @transform_3, window_bounds = array<i64: 2, 18, 128>}, {transform_indices = @transform_4, window_bounds = array<i64: 1, 1, 128>}, {transform_indices = @transform_5, window_bounds = array<i64: 1, 1, 128>}]} {
    %c0 = arith.constant 0 : index
    %c0_0 = arith.constant 0 : index
    %0 = vector.load %arg3[%c0, %c0_0] : memref<1x128xf32, #tpu.memory_space<vmem>>, vector<1x128xf32>
    %cst = arith.constant 0.000000e+00 : f32
    %1 = vector.broadcast %cst : f32 to vector<1x128xf32>
    %cst_1 = arith.constant 0.000000e+00 : f32
    %2 = vector.broadcast %cst_1 : f32 to vector<1x128xf32>
    %cst_2 = arith.constant 0.000000e+00 : f32
    %3 = vector.broadcast %cst_2 : f32 to vector<18x128xf32>
    %c0_3 = arith.constant 0 : index
    %c0_4 = arith.constant 0 : index
    %c0_5 = arith.constant 0 : index
    %4 = vector.load %arg1[%c0_3, %c0_4, %c0_5] : memref<2x20x128xf32, #tpu.memory_space<vmem>>, vector<1x18x128xf32>
    %5 = vector.shape_cast %4 : vector<1x18x128xf32> to vector<18x128xf32>
    %c0_6 = arith.constant 0 : index
    %c0_7 = arith.constant 0 : index
    %c0_8 = arith.constant 0 : index
    %6 = vector.load %arg2[%c0_6, %c0_7, %c0_8] : memref<3x128x128xf32, #tpu.memory_space<vmem>>, vector<1x128x128xf32>
    %7 = vector.shape_cast %6 : vector<1x128x128xf32> to vector<128x128xf32>
    %cst_9 = arith.constant dense<0.000000e+00> : vector<18x128xf32>
    %8 = tpu.matmul %5, %7, %cst_9 {dimension_numbers = #tpu.dot_dimension_numbers<[1], [0], [0], [1], [0, 0, 1, 1], [], []>} : vector<18x128xf32>, vector<128x128xf32>, vector<18x128xf32> -> vector<18x128xf32>
    %9 = arith.addf %3, %8 : vector<18x128xf32>
    %c0_10 = arith.constant 0 : index
    %c1 = arith.constant 1 : index
    %c0_11 = arith.constant 0 : index
    %10 = vector.load %arg1[%c0_10, %c1, %c0_11] : memref<2x20x128xf32, #tpu.memory_space<vmem>>, vector<1x18x128xf32>
    %11 = vector.shape_cast %10 : vector<1x18x128xf32> to vector<18x128xf32>
    %c1_12 = arith.constant 1 : index
    %c0_13 = arith.constant 0 : index
    %c0_14 = arith.constant 0 : index
    %12 = vector.load %arg2[%c1_12, %c0_13, %c0_14] : memref<3x128x128xf32, #tpu.memory_space<vmem>>, vector<1x128x128xf32>
    %13 = vector.shape_cast %12 : vector<1x128x128xf32> to vector<128x128xf32>
    %cst_15 = arith.constant dense<0.000000e+00> : vector<18x128xf32>
    %14 = tpu.matmul %11, %13, %cst_15 {dimension_numbers = #tpu.dot_dimension_numbers<[1], [0], [0], [1], [0, 0, 1, 1], [], []>} : vector<18x128xf32>, vector<128x128xf32>, vector<18x128xf32> -> vector<18x128xf32>
    %15 = arith.addf %9, %14 : vector<18x128xf32>
    %c0_16 = arith.constant 0 : index
    %c2 = arith.constant 2 : index
    %c0_17 = arith.constant 0 : index
    %16 = vector.load %arg1[%c0_16, %c2, %c0_17] : memref<2x20x128xf32, #tpu.memory_space<vmem>>, vector<1x18x128xf32>
    %17 = vector.shape_cast %16 : vector<1x18x128xf32> to vector<18x128xf32>
    %c2_18 = arith.constant 2 : index
    %c0_19 = arith.constant 0 : index
    %c0_20 = arith.constant 0 : index
    %18 = vector.load %arg2[%c2_18, %c0_19, %c0_20] : memref<3x128x128xf32, #tpu.memory_space<vmem>>, vector<1x128x128xf32>
    %19 = vector.shape_cast %18 : vector<1x128x128xf32> to vector<128x128xf32>
    %cst_21 = arith.constant dense<0.000000e+00> : vector<18x128xf32>
    %20 = tpu.matmul %17, %19, %cst_21 {dimension_numbers = #tpu.dot_dimension_numbers<[1], [0], [0], [1], [0, 0, 1, 1], [], []>} : vector<18x128xf32>, vector<128x128xf32>, vector<18x128xf32> -> vector<18x128xf32>
    %21 = arith.addf %15, %20 : vector<18x128xf32>
    %22 = vector.broadcast %0 : vector<1x128xf32> to vector<18x128xf32>
    %23 = arith.addf %21, %22 : vector<18x128xf32>
    %c0_22 = arith.constant 0 : index
    %c0_23 = arith.constant 0 : index
    %c0_24 = arith.constant 0 : index
    %24 = vector.load %arg4[%c0_22, %c0_23, %c0_24] : memref<2x18x128xf32, #tpu.memory_space<vmem>>, vector<1x18x128xf32>
    %25 = vector.shape_cast %24 : vector<1x18x128xf32> to vector<18x128xf32>
    %26 = vector.shape_cast %23 : vector<18x128xf32> to vector<1x18x128xf32>
    tpu.vector_store %arg4[%c0_22, %c0_23, %c0_24], %26 {strides = array<i32>} : memref<2x18x128xf32, #tpu.memory_space<vmem>>, vector<1x18x128xf32>,
    %cst_25 = arith.constant dense<0.000000e+00> : vector<128xf32>
    %27 = vector.multi_reduction <add>, %23, %cst_25 [0] : vector<18x128xf32> to vector<128xf32>
    %28 = vector.shape_cast %27 : vector<128xf32> to vector<1x128xf32>
    %29 = arith.addf %1, %28 : vector<1x128xf32>
    %30 = arith.mulf %23, %23 : vector<18x128xf32>
    %cst_26 = arith.constant dense<0.000000e+00> : vector<128xf32>
    %31 = vector.multi_reduction <add>, %30, %cst_26 [0] : vector<18x128xf32> to vector<128xf32>
    %32 = vector.shape_cast %31 : vector<128xf32> to vector<1x128xf32>
    %33 = arith.addf %2, %32 : vector<1x128xf32>
    %cst_27 = arith.constant 0.000000e+00 : f32
    %34 = vector.broadcast %cst_27 : f32 to vector<18x128xf32>
    %c1_28 = arith.constant 1 : index
    %c0_29 = arith.constant 0 : index
    %c0_30 = arith.constant 0 : index
    %35 = vector.load %arg1[%c1_28, %c0_29, %c0_30] : memref<2x20x128xf32, #tpu.memory_space<vmem>>, vector<1x18x128xf32>
    %36 = vector.shape_cast %35 : vector<1x18x128xf32> to vector<18x128xf32>
    %c0_31 = arith.constant 0 : index
    %c0_32 = arith.constant 0 : index
    %c0_33 = arith.constant 0 : index
    %37 = vector.load %arg2[%c0_31, %c0_32, %c0_33] : memref<3x128x128xf32, #tpu.memory_space<vmem>>, vector<1x128x128xf32>
    %38 = vector.shape_cast %37 : vector<1x128x128xf32> to vector<128x128xf32>
    %cst_34 = arith.constant dense<0.000000e+00> : vector<18x128xf32>
    %39 = tpu.matmul %36, %38, %cst_34 {dimension_numbers = #tpu.dot_dimension_numbers<[1], [0], [0], [1], [0, 0, 1, 1], [], []>} : vector<18x128xf32>, vector<128x128xf32>, vector<18x128xf32> -> vector<18x128xf32>
    %40 = arith.addf %34, %39 : vector<18x128xf32>
    %c1_35 = arith.constant 1 : index
    %c1_36 = arith.constant 1 : index
    %c0_37 = arith.constant 0 : index
    %41 = vector.load %arg1[%c1_35, %c1_36, %c0_37] : memref<2x20x128xf32, #tpu.memory_space<vmem>>, vector<1x18x128xf32>
    %42 = vector.shape_cast %41 : vector<1x18x128xf32> to vector<18x128xf32>
    %c1_38 = arith.constant 1 : index
    %c0_39 = arith.constant 0 : index
    %c0_40 = arith.constant 0 : index
    %43 = vector.load %arg2[%c1_38, %c0_39, %c0_40] : memref<3x128x128xf32, #tpu.memory_space<vmem>>, vector<1x128x128xf32>
    %44 = vector.shape_cast %43 : vector<1x128x128xf32> to vector<128x128xf32>
    %cst_41 = arith.constant dense<0.000000e+00> : vector<18x128xf32>
    %45 = tpu.matmul %42, %44, %cst_41 {dimension_numbers = #tpu.dot_dimension_numbers<[1], [0], [0], [1], [0, 0, 1, 1], [], []>} : vector<18x128xf32>, vector<128x128xf32>, vector<18x128xf32> -> vector<18x128xf32>
    %46 = arith.addf %40, %45 : vector<18x128xf32>
    %c1_42 = arith.constant 1 : index
    %c2_43 = arith.constant 2 : index
    %c0_44 = arith.constant 0 : index
    %47 = vector.load %arg1[%c1_42, %c2_43, %c0_44] : memref<2x20x128xf32, #tpu.memory_space<vmem>>, vector<1x18x128xf32>
    %48 = vector.shape_cast %47 : vector<1x18x128xf32> to vector<18x128xf32>
    %c2_45 = arith.constant 2 : index
    %c0_46 = arith.constant 0 : index
    %c0_47 = arith.constant 0 : index
    %49 = vector.load %arg2[%c2_45, %c0_46, %c0_47] : memref<3x128x128xf32, #tpu.memory_space<vmem>>, vector<1x128x128xf32>
    %50 = vector.shape_cast %49 : vector<1x128x128xf32> to vector<128x128xf32>
    %cst_48 = arith.constant dense<0.000000e+00> : vector<18x128xf32>
    %51 = tpu.matmul %48, %50, %cst_48 {dimension_numbers = #tpu.dot_dimension_numbers<[1], [0], [0], [1], [0, 0, 1, 1], [], []>} : vector<18x128xf32>, vector<128x128xf32>, vector<18x128xf32> -> vector<18x128xf32>
    %52 = arith.addf %46, %51 : vector<18x128xf32>
    %53 = vector.broadcast %0 : vector<1x128xf32> to vector<18x128xf32>
    %54 = arith.addf %52, %53 : vector<18x128xf32>
    %c1_49 = arith.constant 1 : index
    %c0_50 = arith.constant 0 : index
    %c0_51 = arith.constant 0 : index
    %55 = vector.load %arg4[%c1_49, %c0_50, %c0_51] : memref<2x18x128xf32, #tpu.memory_space<vmem>>, vector<1x18x128xf32>
    %56 = vector.shape_cast %55 : vector<1x18x128xf32> to vector<18x128xf32>
    %57 = vector.shape_cast %54 : vector<18x128xf32> to vector<1x18x128xf32>
    tpu.vector_store %arg4[%c1_49, %c0_50, %c0_51], %57 {strides = array<i32>} : memref<2x18x128xf32, #tpu.memory_space<vmem>>, vector<1x18x128xf32>,
    %cst_52 = arith.constant dense<0.000000e+00> : vector<128xf32>
    %58 = vector.multi_reduction <add>, %54, %cst_52 [0] : vector<18x128xf32> to vector<128xf32>
    %59 = vector.shape_cast %58 : vector<128xf32> to vector<1x128xf32>
    %60 = arith.addf %29, %59 : vector<1x128xf32>
    %61 = arith.mulf %54, %54 : vector<18x128xf32>
    %cst_53 = arith.constant dense<0.000000e+00> : vector<128xf32>
    %62 = vector.multi_reduction <add>, %61, %cst_53 [0] : vector<18x128xf32> to vector<128xf32>
    %63 = vector.shape_cast %62 : vector<128xf32> to vector<1x128xf32>
    %64 = arith.addf %33, %63 : vector<1x128xf32>
    %c0_54 = arith.constant 0 : index
    %c0_55 = arith.constant 0 : index
    %c0_56 = arith.constant 0 : index
    %65 = vector.load %arg5[%c0_54, %c0_55, %c0_56] : memref<1x1x128xf32, #tpu.memory_space<vmem>>, vector<1x1x128xf32>
    %66 = vector.shape_cast %65 : vector<1x1x128xf32> to vector<1x128xf32>
    %67 = vector.shape_cast %60 : vector<1x128xf32> to vector<1x1x128xf32>
    tpu.vector_store %arg5[%c0_54, %c0_55, %c0_56], %67 {strides = array<i32>} : memref<1x1x128xf32, #tpu.memory_space<vmem>>, vector<1x1x128xf32>,
    %c0_57 = arith.constant 0 : index
    %c0_58 = arith.constant 0 : index
    %c0_59 = arith.constant 0 : index
    %68 = vector.load %arg6[%c0_57, %c0_58, %c0_59] : memref<1x1x128xf32, #tpu.memory_space<vmem>>, vector<1x1x128xf32>
    %69 = vector.shape_cast %68 : vector<1x1x128xf32> to vector<1x128xf32>
    %70 = vector.shape_cast %64 : vector<1x128xf32> to vector<1x1x128xf32>
    tpu.vector_store %arg6[%c0_57, %c0_58, %c0_59], %70 {strides = array<i32>} : memref<1x1x128xf32, #tpu.memory_space<vmem>>, vector<1x1x128xf32>,
    return
  }
  func.func @transform_0(%arg0: i32) -> (i32, i32, i32) {
    %c0_i32 = arith.constant 0 : i32
    %c0_i32_0 = arith.constant 0 : i32
    %c0_i32_1 = arith.constant 0 : i32
    return %arg0, %c0_i32, %c0_i32_0 : i32, i32, i32
  }
  func.func @transform_1(%arg0: i32) -> (i32, i32, i32) {
    %c0_i32 = arith.constant 0 : i32
    %c0_i32_0 = arith.constant 0 : i32
    %c0_i32_1 = arith.constant 0 : i32
    %c0_i32_2 = arith.constant 0 : i32
    return %c0_i32, %c0_i32_0, %c0_i32_1 : i32, i32, i32
  }
  func.func @transform_2(%arg0: i32) -> (i32, i32) {
    %c0_i32 = arith.constant 0 : i32
    %c0_i32_0 = arith.constant 0 : i32
    %c0_i32_1 = arith.constant 0 : i32
    return %c0_i32, %c0_i32_0 : i32, i32
  }
  func.func @transform_3(%arg0: i32) -> (i32, i32, i32) {
    %c0_i32 = arith.constant 0 : i32
    %c0_i32_0 = arith.constant 0 : i32
    %c0_i32_1 = arith.constant 0 : i32
    return %arg0, %c0_i32, %c0_i32_0 : i32, i32, i32
  }
  func.func @transform_4(%arg0: i32) -> (i32, i32, i32) {
    %c0_i32 = arith.constant 0 : i32
    %c0_i32_0 = arith.constant 0 : i32
    %c0_i32_1 = arith.constant 0 : i32
    return %arg0, %c0_i32, %c0_i32_0 : i32, i32, i32
  }
  func.func @transform_5(%arg0: i32) -> (i32, i32, i32) {
    %c0_i32 = arith.constant 0 : i32
    %c0_i32_0 = arith.constant 0 : i32
    %c0_i32_1 = arith.constant 0 : i32
    return %arg0, %c0_i32, %c0_i32_0 : i32, i32, i32
  }
}

</mosaic_0001>

<llo_original>
// kernel: tpu_custom_call.1
$region0: #{tpu_custom_call.1}
  #allocation0 [shape = 'u32[]', space=smem, size = 0x4, offset = 0x4, fixed_abs, tag = 'smem constant byte address 0x4 - core index']
  #allocation1 [shape = 'u32[72,128]{1,0:T(1,128)}', space=vmem, size = 0x9000, scoped, tag = 'internal scratch']
  %s0 = inlined_call_operand.vmem [shape: f32[2,20,128], index: 0, kind: input, shape index: {}]
  %s1 = inlined_call_operand.hbm [shape: f32[3,128,128], index: 1, kind: input, shape index: {}]
  %s2 = inlined_call_operand.vmem [shape: f32[1,128], index: 2, kind: input, shape index: {}]
  %s3 = inlined_call_operand.vmem [shape: f32[2,18,128], index: 3, kind: output, shape index: {0}]
  %s4 = inlined_call_operand.hbm [shape: f32[1,1,128], index: 4, kind: output, shape index: {1}]
  %s5 = inlined_call_operand.hbm [shape: f32[1,1,128], index: 5, kind: output, shape index: {2}]
  %6 = xla_tuple %s3, %s4, %s5
  %s7 = sld [smem:[#allocation0]]
  $region42: #{tpu_custom_call.1} parent=0
    _
  %s9 = ssub.s32 1, %s7
  %s10 = scalar_select 0, %s9, %s7
  $region1: #{tpu_custom_call.1} parent=0
    #allocation2 [shape = 'u8[196608]{0}', space=vmem, size = 0x30000, scoped, tag = 'input window, operand 1, single buffered']
    #allocation3 [shape = 's32[1]{0}', space=sflag, size = 0x4, scoped, tag = 'scoped memory for tpu_custom_call.1']
    #allocation4 [shape = 's32[1]{0}', space=sflag, size = 0x4, scoped, tag = 'scoped memory for tpu_custom_call.1']
    #allocation5 [shape = 'u8[512]{0}', space=vmem, size = 0x400, scoped, tag = 'output window, operand 1, single buffered']
    #allocation6 [shape = 'u8[512]{0}', space=vmem, size = 0x400, scoped, tag = 'output window, operand 2, single buffered']
    #allocation7 [shape = 's32[1]{0}', space=sflag, size = 0x4, scoped, tag = 'scoped memory for tpu_custom_call.1']
    %11 = vsyncpa [#allocation3], 0
    %12 = vsyncpa [#allocation4], 0
    %13 = vsyncpa [#allocation7], 0
    // Predicated region
    $region2: #{tpu_custom_call.1} parent=1 // pred_check
      _
    $region3: #{tpu_custom_call.1} parent=1 // pred_check_branch
      %15 = sbr.rel (0) target = $region5
    $region4: #{tpu_custom_call.1} parent=1 // pred_region
      _
    $region5: #{tpu_custom_call.1} parent=1 // pred_fallthru
      _
    // Predicated region
    $region6: #{tpu_custom_call.1} parent=1 // pred_check
      _
    $region7: #{tpu_custom_call.1} parent=1 // pred_check_branch
      %17 = sbr.rel (0) target = $region9
    $region8: #{tpu_custom_call.1} parent=1 // pred_region
      %19 = vsyncadd [#allocation3], 0
      %s20 = sshll.u32 %s1, 4
      %s21 = int_to_ptr.hbm [resolvable:$true] %s20
      %s22 = sshll.u32 [#allocation2], 4
      %s23 = int_to_ptr.vmem [resolvable:$true] %s22
      %28 = dma.hbm_to_vmem [thread:$0]  %s21, 6144, %s23, [#allocation3], 128, 128, 8
    $region9: #{tpu_custom_call.1} parent=1 // pred_fallthru
      _
    // Predicated region
    $region10: #{tpu_custom_call.1} parent=1 // pred_check
      _
    $region11: #{tpu_custom_call.1} parent=1 // pred_check_branch
      %30 = sbr.rel (0) target = $region13
    $region12: #{tpu_custom_call.1} parent=1 // pred_region
      _
    $region13: #{tpu_custom_call.1} parent=1 // pred_fallthru
      _
    // Predicated region
    $region14: #{tpu_custom_call.1} parent=1 // pred_check
      _
    $region15: #{tpu_custom_call.1} parent=1 // pred_check_branch
      %32 = sbr.rel (0) target = $region17
    $region16: #{tpu_custom_call.1} parent=1 // pred_region
      %34 = dma.done [#allocation3], 6144
    $region17: #{tpu_custom_call.1} parent=1 // pred_fallthru
      _
    %v35 = vld [vmem:[%s2] sm:$0x1]
    %v36 = vld [vmem:[%s0] sm:$0xff]
    %v37 = vld [vmem:[%s0 + $0x8] sm:$0xff]
    %v38 = vld [vmem:[%s0 + $0x10] sm:$0x3]
    %v39 = vld [vmem:[#allocation2] sm:$0xff]
    %v40 = vld [vmem:[#allocation2 + $0x8] sm:$0xff]
    %v41 = vld [vmem:[#allocation2 + $0x10] sm:$0xff]
    %v42 = vld [vmem:[#allocation2 + $0x18] sm:$0xff]
    %v43 = vld [vmem:[#allocation2 + $0x20] sm:$0xff]
    %v44 = vld [vmem:[#allocation2 + $0x28] sm:$0xff]
    %v45 = vld [vmem:[#allocation2 + $0x30] sm:$0xff]
    %v46 = vld [vmem:[#allocation2 + $0x38] sm:$0xff]
    %v47 = vld [vmem:[#allocation2 + $0x40] sm:$0xff]
    %v48 = vld [vmem:[#allocation2 + $0x48] sm:$0xff]
    %v49 = vld [vmem:[#allocation2 + $0x50] sm:$0xff]
    %v50 = vld [vmem:[#allocation2 + $0x58] sm:$0xff]
    %v51 = vld [vmem:[#allocation2 + $0x60] sm:$0xff]
    %v52 = vld [vmem:[#allocation2 + $0x68] sm:$0xff]
    %v53 = vld [vmem:[#allocation2 + $0x70] sm:$0xff]
    %v54 = vld [vmem:[#allocation2 + $0x78] sm:$0xff]
    %v55 = vld [vmem:[%s0 + $0x1] sm:$0xff]
    %v56 = vld [vmem:[%s0 + $0x9] sm:$0xff]
    %v57 = vld [vmem:[%s0 + $0x11] sm:$0x3]
    %s58 = scalar_lea.vmem [#allocation2], 128
    %v59 = vld [vmem:[%s58] sm:$0xff]
    %v60 = vld [vmem:[%s58 + $0x8] sm:$0xff]
    %v61 = vld [vmem:[%s58 + $0x10] sm:$0xff]
    %v62 = vld [vmem:[%s58 + $0x18] sm:$0xff]
    %v63 = vld [vmem:[%s58 + $0x20] sm:$0xff]
    %v64 = vld [vmem:[%s58 + $0x28] sm:$0xff]
    %v65 = vld [vmem:[%s58 + $0x30] sm:$0xff]
    %v66 = vld [vmem:[%s58 + $0x38] sm:$0xff]
    %v67 = vld [vmem:[%s58 + $0x40] sm:$0xff]
    %v68 = vld [vmem:[%s58 + $0x48] sm:$0xff]
    %v69 = vld [vmem:[%s58 + $0x50] sm:$0xff]
    %v70 = vld [vmem:[%s58 + $0x58] sm:$0xff]
    %v71 = vld [vmem:[%s58 + $0x60] sm:$0xff]
    %v72 = vld [vmem:[%s58 + $0x68] sm:$0xff]
    %v73 = vld [vmem:[%s58 + $0x70] sm:$0xff]
    %v74 = vld [vmem:[%s58 + $0x78] sm:$0xff]
    %75 = vmatpush.msra.mxu0 %v74
    %76 = vmatpush.msra.mxu0 %v73
    %77 = vmatpush.msra.mxu0 %v72
    %78 = vmatpush.msra.mxu0 %v71
    %79 = vmatpush.msra.mxu0 %v70
    %80 = vmatpush.msra.mxu0 %v69
    %81 = vmatpush.msra.mxu0 %v68
    %82 = vmatpush.msra.mxu0 %v67
    %83 = vmatpush.msra.mxu0 %v66
    %84 = vmatpush.msra.mxu0 %v65
    %85 = vmatpush.msra.mxu0 %v64
    %86 = vmatpush.msra.mxu0 %v63
    %87 = vmatpush.msra.mxu0 %v62
    %88 = vmatpush.msra.mxu0 %v61
    %89 = vmatpush.msra.mxu0 %v60
    %90 = vmatpush.msra.mxu0 %v59
    %91 = vmatmul.f32.gmra.mxu0 %v55
    %v92 = vpop.f32.mrf.mxu0
    %v93 = vadd.f32 0.0, %v92
    %94 = vmatmul.f32.gmra.mxu0 %v56
    %v95 = vpop.f32.mrf.mxu0
    %v96 = vadd.f32 0.0, %v95
    %97 = vmatmul.f32.gmra.mxu0 %v57
    %v98 = vpop.f32.mrf.mxu0
    %v99 = vadd.f32 0.0, %v98
    %100 = vdwg.mxu0
    %101 = vmatpush.msra.mxu0 %v54
    %102 = vmatpush.msra.mxu0 %v53
    %103 = vmatpush.msra.mxu0 %v52
    %104 = vmatpush.msra.mxu0 %v51
    %105 = vmatpush.msra.mxu0 %v50
    %106 = vmatpush.msra.mxu0 %v49
    %107 = vmatpush.msra.mxu0 %v48
    %108 = vmatpush.msra.mxu0 %v47
    %109 = vmatpush.msra.mxu0 %v46
    %110 = vmatpush.msra.mxu0 %v45
    %111 = vmatpush.msra.mxu0 %v44
    %112 = vmatpush.msra.mxu0 %v43
    %113 = vmatpush.msra.mxu0 %v42
    %114 = vmatpush.msra.mxu0 %v41
    %115 = vmatpush.msra.mxu0 %v40
    %116 = vmatpush.msra.mxu0 %v39
    %117 = vmatmul.f32.gmra.mxu0 %v36
    %v118 = vpop.f32.mrf.mxu0
    %v119 = vadd.f32 %v93, %v118
    %120 = vmatmul.f32.gmra.mxu0 %v37
    %v121 = vpop.f32.mrf.mxu0
    %v122 = vadd.f32 %v96, %v121
    %123 = vmatmul.f32.gmra.mxu0 %v38
    %v124 = vpop.f32.mrf.mxu0
    %v125 = vadd.f32 %v99, %v124
    %126 = vdwg.mxu0
    %v127 = vld [vmem:[%s0 + $0x2] sm:$0xff]
    %v128 = vld [vmem:[%s0 + $0xa] sm:$0xff]
    %v129 = vld [vmem:[%s0 + $0x12] sm:$0x3]
    %s130 = scalar_lea.vmem [#allocation2], 256
    %v131 = vld [vmem:[%s130] sm:$0xff]
    %v132 = vld [vmem:[%s130 + $0x8] sm:$0xff]
    %v133 = vld [vmem:[%s130 + $0x10] sm:$0xff]
    %v134 = vld [vmem:[%s130 + $0x18] sm:$0xff]
    %v135 = vld [vmem:[%s130 + $0x20] sm:$0xff]
    %v136 = vld [vmem:[%s130 + $0x28] sm:$0xff]
    %v137 = vld [vmem:[%s130 + $0x30] sm:$0xff]
    %v138 = vld [vmem:[%s130 + $0x38] sm:$0xff]
    %v139 = vld [vmem:[%s130 + $0x40] sm:$0xff]
    %v140 = vld [vmem:[%s130 + $0x48] sm:$0xff]
    %v141 = vld [vmem:[%s130 + $0x50] sm:$0xff]
    %v142 = vld [vmem:[%s130 + $0x58] sm:$0xff]
    %v143 = vld [vmem:[%s130 + $0x60] sm:$0xff]
    %v144 = vld [vmem:[%s130 + $0x68] sm:$0xff]
    %v145 = vld [vmem:[%s130 + $0x70] sm:$0xff]
    %v146 = vld [vmem:[%s130 + $0x78] sm:$0xff]
    %147 = vmatpush.msra.mxu0 %v146
    %148 = vmatpush.msra.mxu0 %v145
    %149 = vmatpush.msra.mxu0 %v144
    %150 = vmatpush.msra.mxu0 %v143
    %151 = vmatpush.msra.mxu0 %v142
    %152 = vmatpush.msra.mxu0 %v141
    %153 = vmatpush.msra.mxu0 %v140
    %154 = vmatpush.msra.mxu0 %v139
    %155 = vmatpush.msra.mxu0 %v138
    %156 = vmatpush.msra.mxu0 %v137
    %157 = vmatpush.msra.mxu0 %v136
    %158 = vmatpush.msra.mxu0 %v135
    %159 = vmatpush.msra.mxu0 %v134
    %160 = vmatpush.msra.mxu0 %v133
    %161 = vmatpush.msra.mxu0 %v132
    %162 = vmatpush.msra.mxu0 %v131
    %163 = vmatmul.f32.gmra.mxu0 %v127
    %v164 = vpop.f32.mrf.mxu0
    %v165 = vadd.f32 0.0, %v164
    %166 = vmatmul.f32.gmra.mxu0 %v128
    %v167 = vpop.f32.mrf.mxu0
    %v168 = vadd.f32 0.0, %v167
    %169 = vmatmul.f32.gmra.mxu0 %v129
    %v170 = vpop.f32.mrf.mxu0
    %v171 = vadd.f32 0.0, %v170
    %172 = vdwg.mxu0
    %v173 = vadd.f32 %v119, %v165
    %v174 = vadd.f32 %v122, %v168
    %v175 = vadd.f32 %v125, %v171
    %v177 = vperm.slane %v35, 0
    %v179 = vadd.f32 %v173, %v177
    %v180 = vadd.f32 %v174, %v177
    %v181 = vadd.f32 %v175, %v177
    %182 = vst [vmem:[%s3] sm:$0xff] %v179
    %183 = vst [vmem:[%s3 + $0x8] sm:$0xff] %v180
    %184 = vst [vmem:[%s3 + $0x10] sm:$0x3] %v181
    %v185 = vadd.f32 %v179, %v180
    %vm186 = vcmask 1041408
    %v187 = vsel %vm186, %v181, 0.0
    %v188 = vadd.f32 %v185, %v187
    %v189 = vrot.slane %v188, 4
    %v190 = vadd.f32 %v188, %v189
    %v191 = vrot.slane %v190, 2
    %v192 = vadd.f32 %v190, %v191
    %v193 = vrot.slane %v192, 1
    %v194 = vadd.f32 %v192, %v193
    %v195 = vadd.f32 %v194, 0.0
    %v196 = vmul.f32 %v179, %v179
    %v197 = vmul.f32 %v180, %v180
    %v198 = vmul.f32 %v181, %v181
    %v199 = vadd.f32 %v196, %v197
    %v200 = vsel %vm186, %v198, 0.0
    %v201 = vadd.f32 %v199, %v200
    %v202 = vrot.slane %v201, 4
    %v203 = vadd.f32 %v201, %v202
    %v204 = vrot.slane %v203, 2
    %v205 = vadd.f32 %v203, %v204
    %v206 = vrot.slane %v205, 1
    %v207 = vadd.f32 %v205, %v206
    %v208 = vadd.f32 %v207, 0.0
    %s209 = scalar_lea.vmem %s0, 24
    %v210 = vld [vmem:[%s209] sm:$0xff]
    %v211 = vld [vmem:[%s209 + $0x8] sm:$0xff]
    %v212 = vld [vmem:[%s209 + $0x10] sm:$0x3]
    %v213 = vld [vmem:[#allocation2] sm:$0xff]
    %v214 = vld [vmem:[#allocation2 + $0x8] sm:$0xff]
    %v215 = vld [vmem:[#allocation2 + $0x10] sm:$0xff]
    %v216 = vld [vmem:[#allocation2 + $0x18] sm:$0xff]
    %v217 = vld [vmem:[#allocation2 + $0x20] sm:$0xff]
    %v218 = vld [vmem:[#allocation2 + $0x28] sm:$0xff]
    %v219 = vld [vmem:[#allocation2 + $0x30] sm:$0xff]
    %v220 = vld [vmem:[#allocation2 + $0x38] sm:$0xff]
    %v221 = vld [vmem:[#allocation2 + $0x40] sm:$0xff]
    %v222 = vld [vmem:[#allocation2 + $0x48] sm:$0xff]
    %v223 = vld [vmem:[#allocation2 + $0x50] sm:$0xff]
    %v224 = vld [vmem:[#allocation2 + $0x58] sm:$0xff]
    %v225 = vld [vmem:[#allocation2 + $0x60] sm:$0xff]
    %v226 = vld [vmem:[#allocation2 + $0x68] sm:$0xff]
    %v227 = vld [vmem:[#allocation2 + $0x70] sm:$0xff]
    %v228 = vld [vmem:[#allocation2 + $0x78] sm:$0xff]
    %v229 = vld [vmem:[%s209 + $0x1] sm:$0xff]
    %v230 = vld [vmem:[%s209 + $0x9] sm:$0xff]
    %v231 = vld [vmem:[%s209 + $0x11] sm:$0x3]
    %v232 = vld [vmem:[%s58] sm:$0xff]
    %v233 = vld [vmem:[%s58 + $0x8] sm:$0xff]
    %v234 = vld [vmem:[%s58 + $0x10] sm:$0xff]
    %v235 = vld [vmem:[%s58 + $0x18] sm:$0xff]
    %v236 = vld [vmem:[%s58 + $0x20] sm:$0xff]
    %v237 = vld [vmem:[%s58 + $0x28] sm:$0xff]
    %v238 = vld [vmem:[%s58 + $0x30] sm:$0xff]
    %v239 = vld [vmem:[%s58 + $0x38] sm:$0xff]
    %v240 = vld [vmem:[%s58 + $0x40] sm:$0xff]
    %v241 = vld [vmem:[%s58 + $0x48] sm:$0xff]
    %v242 = vld [vmem:[%s58 + $0x50] sm:$0xff]
    %v243 = vld [vmem:[%s58 + $0x58] sm:$0xff]
    %v244 = vld [vmem:[%s58 + $0x60] sm:$0xff]
    %v245 = vld [vmem:[%s58 + $0x68] sm:$0xff]
    %v246 = vld [vmem:[%s58 + $0x70] sm:$0xff]
    %v247 = vld [vmem:[%s58 + $0x78] sm:$0xff]
    %248 = vmatpush.msra.mxu0 %v247
    %249 = vmatpush.msra.mxu0 %v246
    %250 = vmatpush.msra.mxu0 %v245
    %251 = vmatpush.msra.mxu0 %v244
    %252 = vmatpush.msra.mxu0 %v243
    %253 = vmatpush.msra.mxu0 %v242
    %254 = vmatpush.msra.mxu0 %v241
    %255 = vmatpush.msra.mxu0 %v240
    %256 = vmatpush.msra.mxu0 %v239
    %257 = vmatpush.msra.mxu0 %v238
    %258 = vmatpush.msra.mxu0 %v237
    %259 = vmatpush.msra.mxu0 %v236
    %260 = vmatpush.msra.mxu0 %v235
    %261 = vmatpush.msra.mxu0 %v234
    %262 = vmatpush.msra.mxu0 %v233
    %263 = vmatpush.msra.mxu0 %v232
    %264 = vmatmul.f32.gmra.mxu0 %v229
    %v265 = vpop.f32.mrf.mxu0
    %v266 = vadd.f32 0.0, %v265
    %267 = vmatmul.f32.gmra.mxu0 %v230
    %v268 = vpop.f32.mrf.mxu0
    %v269 = vadd.f32 0.0, %v268
    %270 = vmatmul.f32.gmra.mxu0 %v231
    %v271 = vpop.f32.mrf.mxu0
    %v272 = vadd.f32 0.0, %v271
    %273 = vdwg.mxu0
    %274 = vmatpush.msra.mxu0 %v228
    %275 = vmatpush.msra.mxu0 %v227
    %276 = vmatpush.msra.mxu0 %v226
    %277 = vmatpush.msra.mxu0 %v225
    %278 = vmatpush.msra.mxu0 %v224
    %279 = vmatpush.msra.mxu0 %v223
    %280 = vmatpush.msra.mxu0 %v222
    %281 = vmatpush.msra.mxu0 %v221
    %282 = vmatpush.msra.mxu0 %v220
    %283 = vmatpush.msra.mxu0 %v219
    %284 = vmatpush.msra.mxu0 %v218
    %285 = vmatpush.msra.mxu0 %v217
    %286 = vmatpush.msra.mxu0 %v216
    %287 = vmatpush.msra.mxu0 %v215
    %288 = vmatpush.msra.mxu0 %v214
    %289 = vmatpush.msra.mxu0 %v213
    %290 = vmatmul.f32.gmra.mxu0 %v210
    %v291 = vpop.f32.mrf.mxu0
    %v292 = vadd.f32 %v266, %v291
    %293 = vmatmul.f32.gmra.mxu0 %v211
    %v294 = vpop.f32.mrf.mxu0
    %v295 = vadd.f32 %v269, %v294
    %296 = vmatmul.f32.gmra.mxu0 %v212
    %v297 = vpop.f32.mrf.mxu0
    %v298 = vadd.f32 %v272, %v297
    %299 = vdwg.mxu0
    %v300 = vld [vmem:[%s209 + $0x2] sm:$0xff]
    %v301 = vld [vmem:[%s209 + $0xa] sm:$0xff]
    %v302 = vld [vmem:[%s209 + $0x12] sm:$0x3]
    %v303 = vld [vmem:[%s130] sm:$0xff]
    %v304 = vld [vmem:[%s130 + $0x8] sm:$0xff]
    %v305 = vld [vmem:[%s130 + $0x10] sm:$0xff]
    %v306 = vld [vmem:[%s130 + $0x18] sm:$0xff]
    %v307 = vld [vmem:[%s130 + $0x20] sm:$0xff]
    %v308 = vld [vmem:[%s130 + $0x28] sm:$0xff]
    %v309 = vld [vmem:[%s130 + $0x30] sm:$0xff]
    %v310 = vld [vmem:[%s130 + $0x38] sm:$0xff]
    %v311 = vld [vmem:[%s130 + $0x40] sm:$0xff]
    %v312 = vld [vmem:[%s130 + $0x48] sm:$0xff]
    %v313 = vld [vmem:[%s130 + $0x50] sm:$0xff]
    %v314 = vld [vmem:[%s130 + $0x58] sm:$0xff]
    %v315 = vld [vmem:[%s130 + $0x60] sm:$0xff]
    %v316 = vld [vmem:[%s130 + $0x68] sm:$0xff]
    %v317 = vld [vmem:[%s130 + $0x70] sm:$0xff]
    %v318 = vld [vmem:[%s130 + $0x78] sm:$0xff]
    %319 = vmatpush.msra.mxu0 %v318
    %320 = vmatpush.msra.mxu0 %v317
    %321 = vmatpush.msra.mxu0 %v316
    %322 = vmatpush.msra.mxu0 %v315
    %323 = vmatpush.msra.mxu0 %v314
    %324 = vmatpush.msra.mxu0 %v313
    %325 = vmatpush.msra.mxu0 %v312
    %326 = vmatpush.msra.mxu0 %v311
    %327 = vmatpush.msra.mxu0 %v310
    %328 = vmatpush.msra.mxu0 %v309
    %329 = vmatpush.msra.mxu0 %v308
    %330 = vmatpush.msra.mxu0 %v307
    %331 = vmatpush.msra.mxu0 %v306
    %332 = vmatpush.msra.mxu0 %v305
    %333 = vmatpush.msra.mxu0 %v304
    %334 = vmatpush.msra.mxu0 %v303
    %335 = vmatmul.f32.gmra.mxu0 %v300
    %v336 = vpop.f32.mrf.mxu0
    %v337 = vadd.f32 0.0, %v336
    %338 = vmatmul.f32.gmra.mxu0 %v301
    %v339 = vpop.f32.mrf.mxu0
    %v340 = vadd.f32 0.0, %v339
    %341 = vmatmul.f32.gmra.mxu0 %v302
    %v342 = vpop.f32.mrf.mxu0
    %v343 = vadd.f32 0.0, %v342
    %344 = vdwg.mxu0
    %v345 = vadd.f32 %v292, %v337
    %v346 = vadd.f32 %v295, %v340
    %v347 = vadd.f32 %v298, %v343
    %v348 = vadd.f32 %v345, %v177
    %v349 = vadd.f32 %v346, %v177
    %v350 = vadd.f32 %v347, %v177
    %s351 = scalar_lea.vmem %s3, 24
    %352 = vst [vmem:[%s351] sm:$0xff] %v348
    %353 = vst [vmem:[%s351 + $0x8] sm:$0xff] %v349
    %354 = vst [vmem:[%s351 + $0x10] sm:$0x3] %v350
    %v355 = vadd.f32 %v348, %v349
    %v356 = vsel %vm186, %v350, 0.0
    %v357 = vadd.f32 %v355, %v356
    %v358 = vrot.slane %v357, 4
    %v359 = vadd.f32 %v357, %v358
    %v360 = vrot.slane %v359, 2
    %v361 = vadd.f32 %v359, %v360
    %v362 = vrot.slane %v361, 1
    %v363 = vadd.f32 %v361, %v362
    %v364 = vadd.f32 %v195, %v363
    %v365 = vmul.f32 %v348, %v348
    %v366 = vmul.f32 %v349, %v349
    %v367 = vmul.f32 %v350, %v350
    %v368 = vadd.f32 %v365, %v366
    %v369 = vsel %vm186, %v367, 0.0
    %v370 = vadd.f32 %v368, %v369
    %v371 = vrot.slane %v370, 4
    %v372 = vadd.f32 %v370, %v371
    %v373 = vrot.slane %v372, 2
    %v374 = vadd.f32 %v372, %v373
    %v375 = vrot.slane %v374, 1
    %v376 = vadd.f32 %v374, %v375
    %v377 = vadd.f32 %v208, %v376
    %378 = vst [vmem:[#allocation5] sm:$0x1] %v364
    %379 = vst [vmem:[#allocation6] sm:$0x1] %v377
    // Predicated region
    $region18: #{tpu_custom_call.1} parent=1 // pred_check
      _
    $region19: #{tpu_custom_call.1} parent=1 // pred_check_branch
      %381 = sbr.rel (0) target = $region21
    $region20: #{tpu_custom_call.1} parent=1 // pred_region
      _
    $region21: #{tpu_custom_call.1} parent=1 // pred_fallthru
      _
    // Predicated region
    $region22: #{tpu_custom_call.1} parent=1 // pred_check
      _
    $region23: #{tpu_custom_call.1} parent=1 // pred_check_branch
      %383 = sbr.rel (0) target = $region25
    $region24: #{tpu_custom_call.1} parent=1 // pred_region
      %385 = vsyncadd [#allocation4], 0
      %s387 = sshll.u32 [#allocation5], 4
      %s388 = int_to_ptr.vmem [resolvable:$true] %s387
      %s389 = sshll.u32 %s4, 4
      %s390 = int_to_ptr.hbm [resolvable:$true] %s389
      %392 = dma.vmem_to_hbm [thread:$0]  %s388, 16, %s390, [#allocation4]
    $region25: #{tpu_custom_call.1} parent=1 // pred_fallthru
      _
    // Predicated region
    $region26: #{tpu_custom_call.1} parent=1 // pred_check
      _
    $region27: #{tpu_custom_call.1} parent=1 // pred_check_branch
      %394 = sbr.rel (0) target = $region29
    $region28: #{tpu_custom_call.1} parent=1 // pred_region
      %396 = vsyncadd [#allocation7], 0
      %s398 = sshll.u32 [#allocation6], 4
      %s399 = int_to_ptr.vmem [resolvable:$true] %s398
      %s400 = sshll.u32 %s5, 4
      %s401 = int_to_ptr.hbm [resolvable:$true] %s400
      %403 = dma.vmem_to_hbm [thread:$0]  %s399, 16, %s401, [#allocation7]
    $region29: #{tpu_custom_call.1} parent=1 // pred_fallthru
      _
    // Predicated region
    $region30: #{tpu_custom_call.1} parent=1 // pred_check
      _
    $region31: #{tpu_custom_call.1} parent=1 // pred_check_branch
      %405 = sbr.rel (0) target = $region33
    $region32: #{tpu_custom_call.1} parent=1 // pred_region
      _
    $region33: #{tpu_custom_call.1} parent=1 // pred_fallthru
      _
    // Predicated region
    $region34: #{tpu_custom_call.1} parent=1 // pred_check
      _
    $region35: #{tpu_custom_call.1} parent=1 // pred_check_branch
      %407 = sbr.rel (0) target = $region37
    $region36: #{tpu_custom_call.1} parent=1 // pred_region
      %409 = dma.done [#allocation4], 16
    $region37: #{tpu_custom_call.1} parent=1 // pred_fallthru
      _
    // Predicated region
    $region38: #{tpu_custom_call.1} parent=1 // pred_check
      _
    $region39: #{tpu_custom_call.1} parent=1 // pred_check_branch
      %411 = sbr.rel (0) target = $region41
    $region40: #{tpu_custom_call.1} parent=1 // pred_region
      %413 = dma.done [#allocation7], 16
    $region41: #{tpu_custom_call.1} parent=1 // pred_fallthru
      _
    %414 = vsyncpa [#allocation3], 1
    %415 = vsyncpa [#allocation4], 1
    %416 = vsyncpa [#allocation7], 1

</llo_original>
